<compile_context>
chip_gen: v6e
topology: v6e:2x2x1
jax: 0.10.0
libtpu: 0.0.40
codegen_flags: <defaults>
</compile_context>

<pallas_src>
import jax
import jax.numpy as jnp
from jax.experimental import pallas as pl
from jax.experimental.pallas import tpu as pltpu


def _par2lpc_kernel_factory(lpc_order: int):
    M = lpc_order

    def kernel(k_ref, a_ref):
        # k_ref / a_ref: (M+1, B_TILE) -- coefficient axis on sublanes,
        # batch axis lane-dense on the 128-lane dimension.
        # Load each coefficient as a lane-dense (1, B_TILE) row, compute in f32.
        a = [k_ref[j:j + 1, :].astype(jnp.float32) for j in range(M + 1)]
        # Levinson recursion, fully unrolled (all indices static).
        # TODO(synk): for large lpc_order (>~32) switch to a stacked
        # (M+1, B_TILE) buffer + sublane pltpu.roll to keep vreg pressure O(1).
        for m in range(2, M + 1):
            km = a[m]                 # == k[..., m]; untouched so far
            old = a[1:m]              # snapshot of current a[..., 1:m]
            for j in range(1, m):
                # new a[j] = a[j] + k[m] * a[m - j]
                a[j] = old[j - 1] + km * old[m - 1 - j]
        # Direct lane-dense row stores (no concatenate of 1-lane columns).
        for j in range(M + 1):
            a_ref[j:j + 1, :] = a[j].astype(a_ref.dtype)

    return kernel


def par2lpc(k: jax.Array, lpc_order: int, *, b_tile: int = 1024) -> jax.Array:
    """Convert PARCOR -> LPC coefficients. k: (..., lpc_order+1)."""
    assert lpc_order >= 0
    M1 = lpc_order + 1
    assert k.shape[-1] == M1, "dimension of PARCOR is wrong"

    orig_shape = k.shape
    orig_dtype = k.dtype

    B = 1
    for d in orig_shape[:-1]:
        B *= int(d)

    # Transposed, lane-dense layout: (M+1, B).
    kt = k.reshape(B, M1).T

    # Lane tile must be a multiple of 128; don't over-tile small batches.
    b_tile = max(128, (int(b_tile) // 128) * 128)
    if B <= b_tile:
        b_tile = max(128, ((B + 127) // 128) * 128)
    B_pad = ((B + b_tile - 1) // b_tile) * b_tile
    if B_pad != B:
        kt = jnp.pad(kt, ((0, 0), (0, B_pad - B)))

    grid = (B_pad // b_tile,)

    out_t = pl.pallas_call(
        _par2lpc_kernel_factory(lpc_order),
        out_shape=jax.ShapeDtypeStruct((M1, B_pad), orig_dtype),
        grid=grid,
        in_specs=[pl.BlockSpec((M1, b_tile), lambda i: (0, i))],
        out_specs=pl.BlockSpec((M1, b_tile), lambda i: (0, i)),
        input_output_aliases={0: 0},
        compiler_params=pltpu.CompilerParams(
            dimension_semantics=("parallel",)),
    )(kt)

    return out_t[:, :B].T.reshape(orig_shape)


def _par2lpc_ref(k: jax.Array, lpc_order: int) -> jax.Array:
    """Pure-JAX reference (mirrors the PyTorch loop)."""
    a = k
    for m in range(2, lpc_order + 1):
        km = k[..., m:m + 1]
        am = a[..., 1:m]
        new_am = am + km * jnp.flip(am, axis=-1)
        a = jnp.concatenate([a[..., :1], new_am, a[..., m:]], axis=-1)
    return a


if __name__ == "__main__":
    lpc_order = 7                         # M = 7  ->  M+1 = 8 coefficients
    key = jax.random.PRNGKey(0)

    # Small demo shape: (batch, frames, M+1) = (2, 4, 8).  B = 8 -> single
    # 128-lane tile (padded), grid = (1,).
    k = jax.random.normal(key, (2, 4, lpc_order + 1), dtype=jnp.float32) * 0.5
    a = jax.block_until_ready(par2lpc(k, lpc_order))
    a_ref = _par2lpc_ref(k, lpc_order)
    assert a.shape == k.shape
    assert a.dtype == k.dtype
    assert jnp.allclose(a, a_ref, atol=1e-6, rtol=1e-6)

    # Second check exercising a multi-tile grid plus a remainder tile:
    # B = 2*150 = 300, b_tile = 128 -> B_pad = 384, grid = (3,).
    k2 = jax.random.normal(jax.random.PRNGKey(1),
                           (2, 150, lpc_order + 1), dtype=jnp.float32) * 0.5
    a2 = jax.block_until_ready(par2lpc(k2, lpc_order, b_tile=128))
    a2_ref = _par2lpc_ref(k2, lpc_order)
    assert a2.shape == k2.shape
    assert jnp.allclose(a2, a2_ref, atol=1e-6, rtol=1e-6)

    print("KERNEL_OK")
</pallas_src>

<mosaic_0001>
module attributes {stable_mosaic.version = 11 : i64} {
  func.func @kernel(%arg0: i32, %arg1: memref<8x128xf32, #tpu.memory_space<vmem>>, %arg2: memref<8x128xf32, #tpu.memory_space<vmem>>) attributes {dimension_semantics = [#tpu.dimension_semantics<parallel>], iteration_bounds = array<i64: 1>, scalar_prefetch = 0 : i64, scratch_operands = 0 : i64, tpu.core_type = #tpu.core_type<tc>, window_params = [{transform_indices = @transform_0, window_bounds = array<i64: 8, 128>}, {transform_indices = @transform_1, window_bounds = array<i64: 8, 128>}]} {
    %c0 = arith.constant 0 : index
    %c0_0 = arith.constant 0 : index
    %0 = vector.load %arg1[%c0, %c0_0] : memref<8x128xf32, #tpu.memory_space<vmem>>, vector<1x128xf32>
    %c1 = arith.constant 1 : index
    %c0_1 = arith.constant 0 : index
    %1 = vector.load %arg1[%c1, %c0_1] : memref<8x128xf32, #tpu.memory_space<vmem>>, vector<1x128xf32>
    %c2 = arith.constant 2 : index
    %c0_2 = arith.constant 0 : index
    %2 = vector.load %arg1[%c2, %c0_2] : memref<8x128xf32, #tpu.memory_space<vmem>>, vector<1x128xf32>
    %c3 = arith.constant 3 : index
    %c0_3 = arith.constant 0 : index
    %3 = vector.load %arg1[%c3, %c0_3] : memref<8x128xf32, #tpu.memory_space<vmem>>, vector<1x128xf32>
    %c4 = arith.constant 4 : index
    %c0_4 = arith.constant 0 : index
    %4 = vector.load %arg1[%c4, %c0_4] : memref<8x128xf32, #tpu.memory_space<vmem>>, vector<1x128xf32>
    %c5 = arith.constant 5 : index
    %c0_5 = arith.constant 0 : index
    %5 = vector.load %arg1[%c5, %c0_5] : memref<8x128xf32, #tpu.memory_space<vmem>>, vector<1x128xf32>
    %c6 = arith.constant 6 : index
    %c0_6 = arith.constant 0 : index
    %6 = vector.load %arg1[%c6, %c0_6] : memref<8x128xf32, #tpu.memory_space<vmem>>, vector<1x128xf32>
    %c7 = arith.constant 7 : index
    %c0_7 = arith.constant 0 : index
    %7 = vector.load %arg1[%c7, %c0_7] : memref<8x128xf32, #tpu.memory_space<vmem>>, vector<1x128xf32>
    %8 = arith.mulf %2, %1 : vector<1x128xf32>
    %9 = arith.addf %1, %8 : vector<1x128xf32>
    %10 = arith.mulf %3, %2 : vector<1x128xf32>
    %11 = arith.addf %9, %10 : vector<1x128xf32>
    %12 = arith.mulf %3, %9 : vector<1x128xf32>
    %13 = arith.addf %2, %12 : vector<1x128xf32>
    %14 = arith.mulf %4, %3 : vector<1x128xf32>
    %15 = arith.addf %11, %14 : vector<1x128xf32>
    %16 = arith.mulf %4, %13 : vector<1x128xf32>
    %17 = arith.addf %13, %16 : vector<1x128xf32>
    %18 = arith.mulf %4, %11 : vector<1x128xf32>
    %19 = arith.addf %3, %18 : vector<1x128xf32>
    %20 = arith.mulf %5, %4 : vector<1x128xf32>
    %21 = arith.addf %15, %20 : vector<1x128xf32>
    %22 = arith.mulf %5, %19 : vector<1x128xf32>
    %23 = arith.addf %17, %22 : vector<1x128xf32>
    %24 = arith.mulf %5, %17 : vector<1x128xf32>
    %25 = arith.addf %19, %24 : vector<1x128xf32>
    %26 = arith.mulf %5, %15 : vector<1x128xf32>
    %27 = arith.addf %4, %26 : vector<1x128xf32>
    %28 = arith.mulf %6, %5 : vector<1x128xf32>
    %29 = arith.addf %21, %28 : vector<1x128xf32>
    %30 = arith.mulf %6, %27 : vector<1x128xf32>
    %31 = arith.addf %23, %30 : vector<1x128xf32>
    %32 = arith.mulf %6, %25 : vector<1x128xf32>
    %33 = arith.addf %25, %32 : vector<1x128xf32>
    %34 = arith.mulf %6, %23 : vector<1x128xf32>
    %35 = arith.addf %27, %34 : vector<1x128xf32>
    %36 = arith.mulf %6, %21 : vector<1x128xf32>
    %37 = arith.addf %5, %36 : vector<1x128xf32>
    %38 = arith.mulf %7, %6 : vector<1x128xf32>
    %39 = arith.addf %29, %38 : vector<1x128xf32>
    %40 = arith.mulf %7, %37 : vector<1x128xf32>
    %41 = arith.addf %31, %40 : vector<1x128xf32>
    %42 = arith.mulf %7, %35 : vector<1x128xf32>
    %43 = arith.addf %33, %42 : vector<1x128xf32>
    %44 = arith.mulf %7, %33 : vector<1x128xf32>
    %45 = arith.addf %35, %44 : vector<1x128xf32>
    %46 = arith.mulf %7, %31 : vector<1x128xf32>
    %47 = arith.addf %37, %46 : vector<1x128xf32>
    %48 = arith.mulf %7, %29 : vector<1x128xf32>
    %49 = arith.addf %6, %48 : vector<1x128xf32>
    %c0_8 = arith.constant 0 : index
    %c0_9 = arith.constant 0 : index
    %50 = vector.load %arg2[%c0_8, %c0_9] : memref<8x128xf32, #tpu.memory_space<vmem>>, vector<1x128xf32>
    tpu.vector_store %arg2[%c0_8, %c0_9], %0 {strides = array<i32>} : memref<8x128xf32, #tpu.memory_space<vmem>>, vector<1x128xf32>,
    %c1_10 = arith.constant 1 : index
    %c0_11 = arith.constant 0 : index
    %51 = vector.load %arg2[%c1_10, %c0_11] : memref<8x128xf32, #tpu.memory_space<vmem>>, vector<1x128xf32>
    tpu.vector_store %arg2[%c1_10, %c0_11], %39 {strides = array<i32>} : memref<8x128xf32, #tpu.memory_space<vmem>>, vector<1x128xf32>,
    %c2_12 = arith.constant 2 : index
    %c0_13 = arith.constant 0 : index
    %52 = vector.load %arg2[%c2_12, %c0_13] : memref<8x128xf32, #tpu.memory_space<vmem>>, vector<1x128xf32>
    tpu.vector_store %arg2[%c2_12, %c0_13], %41 {strides = array<i32>} : memref<8x128xf32, #tpu.memory_space<vmem>>, vector<1x128xf32>,
    %c3_14 = arith.constant 3 : index
    %c0_15 = arith.constant 0 : index
    %53 = vector.load %arg2[%c3_14, %c0_15] : memref<8x128xf32, #tpu.memory_space<vmem>>, vector<1x128xf32>
    tpu.vector_store %arg2[%c3_14, %c0_15], %43 {strides = array<i32>} : memref<8x128xf32, #tpu.memory_space<vmem>>, vector<1x128xf32>,
    %c4_16 = arith.constant 4 : index
    %c0_17 = arith.constant 0 : index
    %54 = vector.load %arg2[%c4_16, %c0_17] : memref<8x128xf32, #tpu.memory_space<vmem>>, vector<1x128xf32>
    tpu.vector_store %arg2[%c4_16, %c0_17], %45 {strides = array<i32>} : memref<8x128xf32, #tpu.memory_space<vmem>>, vector<1x128xf32>,
    %c5_18 = arith.constant 5 : index
    %c0_19 = arith.constant 0 : index
    %55 = vector.load %arg2[%c5_18, %c0_19] : memref<8x128xf32, #tpu.memory_space<vmem>>, vector<1x128xf32>
    tpu.vector_store %arg2[%c5_18, %c0_19], %47 {strides = array<i32>} : memref<8x128xf32, #tpu.memory_space<vmem>>, vector<1x128xf32>,
    %c6_20 = arith.constant 6 : index
    %c0_21 = arith.constant 0 : index
    %56 = vector.load %arg2[%c6_20, %c0_21] : memref<8x128xf32, #tpu.memory_space<vmem>>, vector<1x128xf32>
    tpu.vector_store %arg2[%c6_20, %c0_21], %49 {strides = array<i32>} : memref<8x128xf32, #tpu.memory_space<vmem>>, vector<1x128xf32>,
    %c7_22 = arith.constant 7 : index
    %c0_23 = arith.constant 0 : index
    %57 = vector.load %arg2[%c7_22, %c0_23] : memref<8x128xf32, #tpu.memory_space<vmem>>, vector<1x128xf32>
    tpu.vector_store %arg2[%c7_22, %c0_23], %7 {strides = array<i32>} : memref<8x128xf32, #tpu.memory_space<vmem>>, vector<1x128xf32>,
    return
  }
  func.func @transform_0(%arg0: i32) -> (i32, i32) {
    %c0_i32 = arith.constant 0 : i32
    %c0_i32_0 = arith.constant 0 : i32
    return %c0_i32, %arg0 : i32, i32
  }
  func.func @transform_1(%arg0: i32) -> (i32, i32) {
    %c0_i32 = arith.constant 0 : i32
    %c0_i32_0 = arith.constant 0 : i32
    return %c0_i32, %arg0 : i32, i32
  }
}

</mosaic_0001>

<llo_original>
// kernel: tpu_custom_call.1
$region0: #{tpu_custom_call.1}
  #allocation0 [shape = 'u32[]', space=smem, size = 0x4, offset = 0x4, fixed_abs, tag = 'smem constant byte address 0x4 - core index']
  #allocation1 [shape = 'u32[144,128]{1,0:T(1,128)}', space=vmem, size = 0x12000, scoped, tag = 'internal scratch']
  %s0 = inlined_call_operand.hbm [shape: f32[8,128], index: 0, kind: input, shape index: {}, may-alias: {0,1}]
  %s1 = inlined_call_operand.hbm [shape: f32[8,128], index: 1, kind: output, shape index: {}, may-alias: {0,1}]
  %s2 = sld [smem:[#allocation0]]
  $region18: #{tpu_custom_call.1} parent=0
    _
  %s4 = ssub.s32 1, %s2
  %s5 = scalar_select 0, %s4, %s2
  $region1: #{tpu_custom_call.1} parent=0
    #allocation2 [shape = 'u8[4096]{0}', space=vmem, size = 0x1000, scoped, tag = 'input window, operand 0, single buffered']
    #allocation3 [shape = 's32[1]{0}', space=sflag, size = 0x4, scoped, tag = 'scoped memory for tpu_custom_call.1']
    #allocation4 [shape = 's32[1]{0}', space=sflag, size = 0x4, scoped, tag = 'scoped memory for tpu_custom_call.1']
    #allocation5 [shape = 'u8[4096]{0}', space=vmem, size = 0x1000, scoped, tag = 'output window, operand 0, single buffered']
    %6 = vsyncpa [#allocation3], 0
    %7 = vsyncpa [#allocation4], 0
    // Predicated region
    $region2: #{tpu_custom_call.1} parent=1 // pred_check
      _
    $region3: #{tpu_custom_call.1} parent=1 // pred_check_branch
      %9 = sbr.rel (0) target = $region5
    $region4: #{tpu_custom_call.1} parent=1 // pred_region
      %s11 = ssub.s32 128, 128
      %12 = vsyncadd [#allocation3], %s11
      %s14 = sshll.u32 [#allocation2], 4
      %s15 = int_to_ptr.vmem [resolvable:$true] %s14
      %17 = dma.hbm_to_vmem [thread:$0]  %s0, 128, %s15, [#allocation3]
    $region5: #{tpu_custom_call.1} parent=1 // pred_fallthru
      _
    // Predicated region
    $region6: #{tpu_custom_call.1} parent=1 // pred_check
      _
    $region7: #{tpu_custom_call.1} parent=1 // pred_check_branch
      %19 = sbr.rel (0) target = $region9
    $region8: #{tpu_custom_call.1} parent=1 // pred_region
      %20 = dma.done [#allocation3], 128
    $region9: #{tpu_custom_call.1} parent=1 // pred_fallthru
      _
    %v21 = vld [vmem:[#allocation2] sm:$0x1]
    %v22 = vld [vmem:[#allocation2 + $0x1] sm:$0x1]
    %v23 = vld [vmem:[#allocation2 + $0x2] sm:$0x1]
    %v24 = vld [vmem:[#allocation2 + $0x3] sm:$0x1]
    %v25 = vld [vmem:[#allocation2 + $0x4] sm:$0x1]
    %v26 = vld [vmem:[#allocation2 + $0x5] sm:$0x1]
    %v27 = vld [vmem:[#allocation2 + $0x6] sm:$0x1]
    %v28 = vld [vmem:[#allocation2 + $0x7] sm:$0x1]
    %v29 = vmul.f32 %v23, %v22
    %v30 = vadd.f32 %v22, %v29
    %v31 = vmul.f32 %v24, %v23
    %v32 = vadd.f32 %v30, %v31
    %v33 = vmul.f32 %v24, %v30
    %v34 = vadd.f32 %v23, %v33
    %v35 = vmul.f32 %v25, %v24
    %v36 = vadd.f32 %v32, %v35
    %v37 = vmul.f32 %v25, %v34
    %v38 = vadd.f32 %v34, %v37
    %v39 = vmul.f32 %v25, %v32
    %v40 = vadd.f32 %v24, %v39
    %v41 = vmul.f32 %v26, %v25
    %v42 = vadd.f32 %v36, %v41
    %v43 = vmul.f32 %v26, %v40
    %v44 = vadd.f32 %v38, %v43
    %v45 = vmul.f32 %v26, %v38
    %v46 = vadd.f32 %v40, %v45
    %v47 = vmul.f32 %v26, %v36
    %v48 = vadd.f32 %v25, %v47
    %v49 = vmul.f32 %v27, %v26
    %v50 = vadd.f32 %v42, %v49
    %v51 = vmul.f32 %v27, %v48
    %v52 = vadd.f32 %v44, %v51
    %v53 = vmul.f32 %v27, %v46
    %v54 = vadd.f32 %v46, %v53
    %v55 = vmul.f32 %v27, %v44
    %v56 = vadd.f32 %v48, %v55
    %v57 = vmul.f32 %v27, %v42
    %v58 = vadd.f32 %v26, %v57
    %v59 = vmul.f32 %v28, %v27
    %v60 = vadd.f32 %v50, %v59
    %v61 = vmul.f32 %v28, %v58
    %v62 = vadd.f32 %v52, %v61
    %v63 = vmul.f32 %v28, %v56
    %v64 = vadd.f32 %v54, %v63
    %v65 = vmul.f32 %v28, %v54
    %v66 = vadd.f32 %v56, %v65
    %v67 = vmul.f32 %v28, %v52
    %v68 = vadd.f32 %v58, %v67
    %v69 = vmul.f32 %v28, %v50
    %v70 = vadd.f32 %v27, %v69
    %71 = vst [vmem:[#allocation5] sm:$0x1] %v21
    %72 = vst [vmem:[#allocation5 + $0x1] sm:$0x1] %v60
    %73 = vst [vmem:[#allocation5 + $0x2] sm:$0x1] %v62
    %74 = vst [vmem:[#allocation5 + $0x3] sm:$0x1] %v64
    %75 = vst [vmem:[#allocation5 + $0x4] sm:$0x1] %v66
    %76 = vst [vmem:[#allocation5 + $0x5] sm:$0x1] %v68
    %77 = vst [vmem:[#allocation5 + $0x6] sm:$0x1] %v70
    %78 = vst [vmem:[#allocation5 + $0x7] sm:$0x1] %v28
    // Predicated region
    $region10: #{tpu_custom_call.1} parent=1 // pred_check
      _
    $region11: #{tpu_custom_call.1} parent=1 // pred_check_branch
      %80 = sbr.rel (0) target = $region13
    $region12: #{tpu_custom_call.1} parent=1 // pred_region
      %s82 = ssub.s32 128, 128
      %83 = vsyncadd [#allocation4], %s82
      %s85 = sshll.u32 [#allocation5], 4
      %s86 = int_to_ptr.vmem [resolvable:$true] %s85
      %88 = dma.vmem_to_hbm [thread:$0]  %s86, 128, %s1, [#allocation4]
    $region13: #{tpu_custom_call.1} parent=1 // pred_fallthru
      _
    // Predicated region
    $region14: #{tpu_custom_call.1} parent=1 // pred_check
      _
    $region15: #{tpu_custom_call.1} parent=1 // pred_check_branch
      %90 = sbr.rel (0) target = $region17
    $region16: #{tpu_custom_call.1} parent=1 // pred_region
      %91 = dma.done [#allocation4], 128
    $region17: #{tpu_custom_call.1} parent=1 // pred_fallthru
      _
    %92 = vsyncpa [#allocation3], 1
    %93 = vsyncpa [#allocation4], 1

</llo_original>
